<compile_context>
chip_gen: v6e
topology: v6e:2x2x1
jax: 0.10.0
libtpu: 0.0.40
codegen_flags: <defaults>
</compile_context>

<pallas_src>
import jax
import jax.numpy as jnp
from jax.experimental import pallas as pl
from jax.experimental.pallas import tpu as pltpu


def _round_up(a: int, b: int) -> int:
    return (a + b - 1) // b * b


def _make_kernel(nb: int, b: int, compute_dtype, precision):
    """Kernel factory. Grid = (column stripe j [parallel], row tile i [carried])."""

    def kernel(x_ref, o_ref, carry_ref, lb_ref):
        # Reset the per-stripe carry and (re)build the small lower-triangular
        # scan operator at the top of every column stripe.  Gating on the row
        # axis (the "arbitrary" axis) keeps this correct even when the
        # parallel stripe axis is sharded across v7x's two TensorCores.
        @pl.when(pl.program_id(1) == 0)
        def _():
            carry_ref[...] = jnp.zeros_like(carry_ref)
            r = jax.lax.broadcasted_iota(jnp.int32, (b, b), 0)
            c = jax.lax.broadcasted_iota(jnp.int32, (b, b), 1)
            lb_ref[...] = (r >= c).astype(lb_ref.dtype)   # inclusive-scan L

        lb = lb_ref[...]                                   # (b, b)
        off = carry_ref[...]                               # (1, tile_n) f32 running sum

        # Two-level blocked scan: per 128-row sub-block, an MXU triangular
        # matmul gives the local inclusive scan; the running offset `off`
        # (carry + previous sub-blocks) is a single broadcast add.
        for i in range(nb):
            xi = x_ref[pl.ds(i * b, b), :].astype(compute_dtype)   # bf16 stays bf16
            yi = jnp.dot(lb, xi,
                         preferred_element_type=jnp.float32,
                         precision=precision)              # (b, tile_n) f32
            o_ref[pl.ds(i * b, b), :] = (yi + off).astype(o_ref.dtype)
            # Carry update is the last row of the local scan (= column sum of
            # the sub-block) — no extra full-tile reduction.
            off = off + yi[b - 1:b, :]

        carry_ref[...] = off

    return kernel


def cumsum_dim0(x: jax.Array, *, tile_m: int = 256, tile_n: int | None = None) -> jax.Array:
    """torch.cumsum(x, dim=0) for inputs of any rank >= 1."""
    orig_shape = x.shape
    M = orig_shape[0]
    x2 = x.reshape(M, -1)                       # flatten trailing dims -> lanes
    N = x2.shape[1]

    if M == 0 or N == 0:
        return jnp.cumsum(x, axis=0)            # degenerate shapes
    if not jnp.issubdtype(x2.dtype, jnp.floating):
        # TODO(synk): integer cumsum needs an exact integer accumulation path;
        # fall back to XLA so torch.cumsum integer semantics are preserved.
        return jnp.cumsum(x, axis=0)

    itemsize = jnp.dtype(x2.dtype).itemsize
    # bf16 goes to the MXU natively (f32 accumulation via preferred_element_type);
    # everything else computes in f32 with exact (HIGHEST) multi-pass precision.
    if x2.dtype == jnp.bfloat16:
        compute_dtype, precision = jnp.bfloat16, None
    else:
        compute_dtype, precision = jnp.float32, jax.lax.Precision.HIGHEST

    if tile_n is None:
        tile_n = 4096 if itemsize <= 2 else 2048

    # --- Row tiling (carried / "arbitrary" axis). Sub-block b is MXU-native 128.
    row_align = {4: 8, 2: 16, 1: 32}.get(itemsize, 8)
    tile_m = min(tile_m, _round_up(M, row_align))
    if tile_m > 128:
        b = 128
        tile_m = _round_up(tile_m, b)
    else:
        b = tile_m
    nb = tile_m // b
    m_pad = _round_up(M, tile_m)

    # --- Column tiling (parallel axis). Ensure >=2 stripes when N allows so
    # both v7x TensorCores get work (harmless on single-TC v5e/v6e).
    n128 = _round_up(N, 128)
    lanes = n128 // 128
    tile_n = min(tile_n, n128)
    if lanes >= 2 and n128 // tile_n < 2:
        tile_n = 128 * (lanes // 2)
    n_pad = _round_up(N, tile_n)

    xp = x2
    if (m_pad, n_pad) != (M, N):
        xp = jnp.pad(x2, ((0, m_pad - M), (0, n_pad - N)))

    grid = (n_pad // tile_n, m_pad // tile_m)   # (parallel stripes, carried rows)

    # VMEM budget derived from the actual tile footprint (x + out double-
    # buffered, L scratch, carry, in-flight f32 partials) with headroom.
    cbytes = jnp.dtype(compute_dtype).itemsize
    raw = (2 * tile_m * tile_n * itemsize        # x tile, double-buffered
           + 2 * tile_m * tile_n * itemsize      # out tile, double-buffered
           + b * b * cbytes                      # L scratch
           + 8 * tile_n * 4                      # carry (sublane-padded)
           + 2 * b * tile_n * 4)                 # f32 sub-block partials
    vmem_limit = min(max(int(1.25 * raw) + (4 << 20), 16 << 20), 64 << 20)

    out = pl.pallas_call(
        _make_kernel(nb, b, compute_dtype, precision),
        out_shape=jax.ShapeDtypeStruct((m_pad, n_pad), x2.dtype),
        grid_spec=pltpu.PrefetchScalarGridSpec(
            num_scalar_prefetch=0,
            grid=grid,
            in_specs=[pl.BlockSpec((tile_m, tile_n), lambda j, i: (i, j))],
            out_specs=pl.BlockSpec((tile_m, tile_n), lambda j, i: (i, j)),
            scratch_shapes=[
                pltpu.VMEM((1, tile_n), jnp.float32),      # per-stripe carry
                pltpu.VMEM((b, b), compute_dtype),         # on-chip triangular L
            ],
        ),
        compiler_params=pltpu.CompilerParams(
            # Column stripes are independent (megacore / 2-TC shardable); the
            # row axis carries the running sum and must stay sequential.
            dimension_semantics=("parallel", "arbitrary"),
            vmem_limit_bytes=vmem_limit,
        ),
    )(xp)

    return out[:M, :N].reshape(orig_shape)


if __name__ == "__main__":
    key = jax.random.PRNGKey(0)
    k1, k2, k3 = jax.random.split(key, 3)

    # Small 3-D f32 input (shape consistent with the cumsum test module), dim=0.
    x3 = jax.random.normal(k1, (8, 4, 16), dtype=jnp.float32)
    out3 = jax.block_until_ready(cumsum_dim0(x3))
    ref3 = jnp.cumsum(x3, axis=0)
    assert out3.shape == ref3.shape and out3.dtype == ref3.dtype
    assert jnp.allclose(out3, ref3, atol=1e-5, rtol=1e-5), "3-D f32 cumsum mismatch"

    # Ragged 2-D f32: default tiles exercise the two-level (nb=2) blocked scan
    # and the >=2-stripe split; tile_m=64 exercises the cross-tile carry.
    x_f32 = jax.random.normal(k2, (200, 320), dtype=jnp.float32)
    ref_f32 = jnp.cumsum(x_f32, axis=0)
    out_a = jax.block_until_ready(cumsum_dim0(x_f32))
    out_b = jax.block_until_ready(cumsum_dim0(x_f32, tile_m=64))
    assert jnp.allclose(out_a, ref_f32, atol=1e-4, rtol=1e-4), "f32 cumsum mismatch (default tiles)"
    assert jnp.allclose(out_b, ref_f32, atol=1e-4, rtol=1e-4), "f32 cumsum mismatch (tile_m=64)"

    # bf16: fed natively to the MXU, f32 accumulation inside the kernel.
    x_bf16 = jax.random.normal(k3, (48, 160), dtype=jnp.bfloat16)
    out_bf16 = jax.block_until_ready(cumsum_dim0(x_bf16))
    ref_bf16 = jnp.cumsum(x_bf16.astype(jnp.float32), axis=0).astype(jnp.bfloat16)
    assert out_bf16.shape == ref_bf16.shape and out_bf16.dtype == ref_bf16.dtype
    assert jnp.allclose(out_bf16.astype(jnp.float32), ref_bf16.astype(jnp.float32),
                        atol=2e-2, rtol=2e-2), "bf16 cumsum mismatch"

    print("KERNEL_OK")
</pallas_src>

<mosaic_0001>
module attributes {stable_mosaic.version = 11 : i64} {
  func.func @kernel(%arg0: i32, %arg1: i32, %arg2: memref<8x128xf32, #tpu.memory_space<vmem>>, %arg3: memref<8x128xf32, #tpu.memory_space<vmem>>, %arg4: memref<1x128xf32, #tpu.memory_space<vmem>>, %arg5: memref<8x8xf32, #tpu.memory_space<vmem>>) attributes {dimension_semantics = [#tpu.dimension_semantics<parallel>, #tpu.dimension_semantics<arbitrary>], iteration_bounds = array<i64: 1, 1>, scalar_prefetch = 0 : i64, scratch_operands = 2 : i64, tpu.core_type = #tpu.core_type<tc>, window_params = [{transform_indices = @transform_0, window_bounds = array<i64: 8, 128>}, {transform_indices = @transform_1, window_bounds = array<i64: 8, 128>}]} {
    %c0_i32 = arith.constant 0 : i32
    %0 = arith.cmpi eq, %arg1, %c0_i32 : i32
    %1 = arith.extui %0 : i1 to i32
    %c0_i32_0 = arith.constant 0 : i32
    %2 = arith.cmpi ne, %1, %c0_i32_0 : i32
    scf.if %2 {
      %cst_10 = arith.constant 0.000000e+00 : f32
      %13 = vector.broadcast %cst_10 : f32 to vector<1x128xf32>
      %c0_11 = arith.constant 0 : index
      %c0_12 = arith.constant 0 : index
      %14 = vector.load %arg4[%c0_11, %c0_12] : memref<1x128xf32, #tpu.memory_space<vmem>>, vector<1x128xf32>
      tpu.vector_store %arg4[%c0_11, %c0_12], %13 {strides = array<i32>} : memref<1x128xf32, #tpu.memory_space<vmem>>, vector<1x128xf32>,
      %15 = tpu.iota {dimensions = array<i32: 0>} : vector<8x8xi32>
      %16 = tpu.iota {dimensions = array<i32: 1>} : vector<8x8xi32>
      %17 = arith.cmpi sge, %15, %16 : vector<8x8xi32>
      %18 = arith.extui %17 : vector<8x8xi1> to vector<8x8xi32>
      %19 = arith.sitofp %18 : vector<8x8xi32> to vector<8x8xf32>
      %c0_13 = arith.constant 0 : index
      %c0_14 = arith.constant 0 : index
      %20 = vector.load %arg5[%c0_13, %c0_14] : memref<8x8xf32, #tpu.memory_space<vmem>>, vector<8x8xf32>
      tpu.vector_store %arg5[%c0_13, %c0_14], %19 {strides = array<i32>} : memref<8x8xf32, #tpu.memory_space<vmem>>, vector<8x8xf32>,
    } else {
    }
    %c0 = arith.constant 0 : index
    %c0_1 = arith.constant 0 : index
    %3 = vector.load %arg5[%c0, %c0_1] : memref<8x8xf32, #tpu.memory_space<vmem>>, vector<8x8xf32>
    %c0_2 = arith.constant 0 : index
    %c0_3 = arith.constant 0 : index
    %4 = vector.load %arg4[%c0_2, %c0_3] : memref<1x128xf32, #tpu.memory_space<vmem>>, vector<1x128xf32>
    %c0_4 = arith.constant 0 : index
    %c0_5 = arith.constant 0 : index
    %5 = vector.load %arg2[%c0_4, %c0_5] : memref<8x128xf32, #tpu.memory_space<vmem>>, vector<8x128xf32>
    %cst = arith.constant dense<0.000000e+00> : vector<8x128xf32>
    %6 = tpu.matmul %3, %5, %cst {dimension_numbers = #tpu.dot_dimension_numbers<[1], [0], [0], [1], [0, 0, 1, 1], [], []>, precision = #tpu.contract_precision<fp32>} : vector<8x8xf32>, vector<8x128xf32>, vector<8x128xf32> -> vector<8x128xf32>
    %7 = vector.broadcast %4 : vector<1x128xf32> to vector<8x128xf32>
    %8 = arith.addf %6, %7 : vector<8x128xf32>
    %c0_6 = arith.constant 0 : index
    %c0_7 = arith.constant 0 : index
    %9 = vector.load %arg3[%c0_6, %c0_7] : memref<8x128xf32, #tpu.memory_space<vmem>>, vector<8x128xf32>
    tpu.vector_store %arg3[%c0_6, %c0_7], %8 {strides = array<i32>} : memref<8x128xf32, #tpu.memory_space<vmem>>, vector<8x128xf32>,
    %10 = vector.extract_strided_slice %6 {offsets = [7, 0], sizes = [1, 128], strides = [1, 1]} : vector<8x128xf32> to vector<1x128xf32>
    %11 = arith.addf %4, %10 : vector<1x128xf32>
    %c0_8 = arith.constant 0 : index
    %c0_9 = arith.constant 0 : index
    %12 = vector.load %arg4[%c0_8, %c0_9] : memref<1x128xf32, #tpu.memory_space<vmem>>, vector<1x128xf32>
    tpu.vector_store %arg4[%c0_8, %c0_9], %11 {strides = array<i32>} : memref<1x128xf32, #tpu.memory_space<vmem>>, vector<1x128xf32>,
    return
  }
  func.func @transform_0(%arg0: i32, %arg1: i32) -> (i32, i32) {
    %c0_i32 = arith.constant 0 : i32
    return %arg1, %arg0 : i32, i32
  }
  func.func @transform_1(%arg0: i32, %arg1: i32) -> (i32, i32) {
    %c0_i32 = arith.constant 0 : i32
    return %arg1, %arg0 : i32, i32
  }
}

</mosaic_0001>

<llo_original>
// kernel: tpu_custom_call.1
$region0: #{tpu_custom_call.1}
  #allocation0 [shape = 'u32[]', space=smem, size = 0x4, offset = 0x4, fixed_abs, tag = 'smem constant byte address 0x4 - core index']
  #allocation1 [shape = 'u32[144,128]{1,0:T(1,128)}', space=vmem, size = 0x12000, scoped, tag = 'internal scratch']
  #allocation2 [shape = 'f32[1,128]{1,0:T(1,128)}', space=vmem, size = 0x200, scoped, tag = 'scratch operand']
  #allocation3 [shape = 'f32[8,8]{1,0:T(8,128)}', space=vmem, size = 0x1000, scoped, tag = 'scratch operand']
  %s0 = inlined_call_operand.hbm [shape: f32[8,128], index: 0, kind: input, shape index: {}]
  %s1 = inlined_call_operand.hbm [shape: f32[8,128], index: 1, kind: output, shape index: {}]
  %s2 = sld [smem:[#allocation0]]
  $region22: #{tpu_custom_call.1} parent=0
    _
  %s4 = ssub.s32 1, %s2
  %s5 = scalar_select 0, %s4, %s2
  $region1: #{tpu_custom_call.1} parent=0
    #allocation4 [shape = 'u8[4096]{0}', space=vmem, size = 0x1000, scoped, tag = 'input window, operand 0, single buffered']
    #allocation5 [shape = 's32[1]{0}', space=sflag, size = 0x4, scoped, tag = 'scoped memory for tpu_custom_call.1']
    #allocation6 [shape = 's32[1]{0}', space=sflag, size = 0x4, scoped, tag = 'scoped memory for tpu_custom_call.1']
    #allocation7 [shape = 'u8[4096]{0}', space=vmem, size = 0x1000, scoped, tag = 'output window, operand 0, single buffered']
    %6 = vsyncpa [#allocation5], 0
    %7 = vsyncpa [#allocation6], 0
    // Predicated region
    $region2: #{tpu_custom_call.1} parent=1 // pred_check
      _
    $region3: #{tpu_custom_call.1} parent=1 // pred_check_branch
      %9 = sbr.rel (0) target = $region5
    $region4: #{tpu_custom_call.1} parent=1 // pred_region
      %s11 = ssub.s32 128, 128
      %12 = vsyncadd [#allocation5], %s11
      %s14 = sshll.u32 [#allocation4], 4
      %s15 = int_to_ptr.vmem [resolvable:$true] %s14
      %17 = dma.hbm_to_vmem [thread:$0]  %s0, 128, %s15, [#allocation5]
    $region5: #{tpu_custom_call.1} parent=1 // pred_fallthru
      _
    // Predicated region
    $region6: #{tpu_custom_call.1} parent=1 // pred_check
      _
    $region7: #{tpu_custom_call.1} parent=1 // pred_check_branch
      %19 = sbr.rel (0) target = $region9
    $region8: #{tpu_custom_call.1} parent=1 // pred_region
      %20 = dma.done [#allocation5], 128
    $region9: #{tpu_custom_call.1} parent=1 // pred_fallthru
      _
    %p21 = scmp.eq.s32.totalorder 0, 0
    // Predicated region
    $region10: #{tpu_custom_call.1} parent=1 // pred_check
      %p22 = pneg %p21
    $region11: #{tpu_custom_call.1} parent=1 // pred_check_branch
      %24 = sbr.rel (%p22) target = $region13
    $region12: #{tpu_custom_call.1} parent=1 // pred_region
      %25 = vst [vmem:[#allocation2] sm:$0x1] 0.0
      %v26 = vlaneseq
      %v27 = vshrl.u32 %v26, 7
      %v28 = vlaneseq
      %v29 = vand.u32 %v28, 127
      %vm30 = vcmp.ge.s32.totalorder %v27, %v29
      %v31 = vsel %vm30, 1, 0
      %v32 = vcvt.s32.f32 %v31
      %vm33 = vcmask 64512
      %34 = vst.msk [vmem:[#allocation3] sm:$0xff] %vm33, %v32
    $region13: #{tpu_custom_call.1} parent=1 // pred_fallthru
      _
    %v35 = vld [vmem:[#allocation3] sm:$0xff]
    %v36 = vld [vmem:[#allocation2] sm:$0x1]
    %v37 = vld [vmem:[#allocation4] sm:$0xff]
    %vm38 = vcmask 64512
    %v40 = vsel %vm38, %v35, 0
    %42 = vmatprep.subr.mxu0 0.0
    %43 = vmatpush1.msra.mxu0 0.0
    %44 = vmatprep.subr.mxu0 0.0
    %45 = vmatpush1.msra.mxu0 0.0
    %46 = vmatprep.subr.mxu0 0.0
    %47 = vmatpush1.msra.mxu0 0.0
    %48 = vmatprep.subr.mxu0 0.0
    %49 = vmatpush1.msra.mxu0 0.0
    %50 = vmatprep.subr.mxu0 0.0
    %51 = vmatpush1.msra.mxu0 0.0
    %52 = vmatprep.subr.mxu0 0.0
    %53 = vmatpush1.msra.mxu0 0.0
    %54 = vmatprep.subr.mxu0 0.0
    %55 = vmatpush1.msra.mxu0 0.0
    %56 = vmatprep.subr.mxu0 0.0
    %57 = vmatpush1.msra.mxu0 0.0
    %58 = vmatprep.subr.mxu0 0.0
    %59 = vmatpush1.msra.mxu0 0.0
    %60 = vmatprep.subr.mxu0 0.0
    %61 = vmatpush1.msra.mxu0 0.0
    %62 = vmatprep.subr.mxu0 0.0
    %63 = vmatpush1.msra.mxu0 0.0
    %64 = vmatprep.subr.mxu0 0.0
    %65 = vmatpush1.msra.mxu0 0.0
    %66 = vmatprep.subr.mxu0 0.0
    %67 = vmatpush1.msra.mxu0 0.0
    %68 = vmatprep.subr.mxu0 0.0
    %69 = vmatpush1.msra.mxu0 0.0
    %70 = vmatprep.subr.mxu0 0.0
    %71 = vmatpush1.msra.mxu0 0.0
    %72 = vmatprep.subr.mxu0 0.0
    %v73 = vand.u32 %v37, 4294901760
    %74 = vmatpush1.msra.mxu0 %v73
    %75 = vmatprep.subr.mxu0 0.0
    %76 = vmatpush2.msra.mxu0 0.0
    %77 = vmatprep.subr.mxu0 0.0
    %78 = vmatpush2.msra.mxu0 0.0
    %79 = vmatprep.subr.mxu0 0.0
    %80 = vmatpush2.msra.mxu0 0.0
    %81 = vmatprep.subr.mxu0 0.0
    %82 = vmatpush2.msra.mxu0 0.0
    %83 = vmatprep.subr.mxu0 0.0
    %84 = vmatpush2.msra.mxu0 0.0
    %85 = vmatprep.subr.mxu0 0.0
    %86 = vmatpush2.msra.mxu0 0.0
    %87 = vmatprep.subr.mxu0 0.0
    %88 = vmatpush2.msra.mxu0 0.0
    %89 = vmatprep.subr.mxu0 0.0
    %90 = vmatpush2.msra.mxu0 0.0
    %91 = vmatprep.subr.mxu0 0.0
    %92 = vmatpush2.msra.mxu0 0.0
    %93 = vmatprep.subr.mxu0 0.0
    %94 = vmatpush2.msra.mxu0 0.0
    %95 = vmatprep.subr.mxu0 0.0
    %96 = vmatpush2.msra.mxu0 0.0
    %97 = vmatprep.subr.mxu0 0.0
    %98 = vmatpush2.msra.mxu0 0.0
    %99 = vmatprep.subr.mxu0 0.0
    %100 = vmatpush2.msra.mxu0 0.0
    %101 = vmatprep.subr.mxu0 0.0
    %102 = vmatpush2.msra.mxu0 0.0
    %103 = vmatprep.subr.mxu0 0.0
    %104 = vmatpush2.msra.mxu0 0.0
    %105 = vmatprep.subr.mxu0 0.0
    %106 = vmatpush2.msra.mxu0 0.0
    %107 = vmatprep.mubr.f32.mxu0 0.0
    %v108 = vand.u32 %v40, 4294901760
    %v109 = vsub.f32 %v40, %v108
    %v110 = vand.u32 %v109, 4294901760
    %v111 = vsub.f32 %v109, %v110
    %v112 = vand.u32 %v111, 4294901760
    %113 = vmatmul.mubr.f32.gmra.mxu0 %v112
    %v114 = vpop.f32.mrf.mxu0
    %v115 = vadd.f32 0.0, %v114
    %v116 = vpop.f32.mrf.mxu0
    %117 = vdwg.mxu0
    %118 = vmatprep.subr.mxu0 0.0
    %119 = vmatpush1.msra.mxu0 0.0
    %120 = vmatprep.subr.mxu0 0.0
    %121 = vmatpush1.msra.mxu0 0.0
    %122 = vmatprep.subr.mxu0 0.0
    %123 = vmatpush1.msra.mxu0 0.0
    %124 = vmatprep.subr.mxu0 0.0
    %125 = vmatpush1.msra.mxu0 0.0
    %126 = vmatprep.subr.mxu0 0.0
    %127 = vmatpush1.msra.mxu0 0.0
    %128 = vmatprep.subr.mxu0 0.0
    %129 = vmatpush1.msra.mxu0 0.0
    %130 = vmatprep.subr.mxu0 0.0
    %131 = vmatpush1.msra.mxu0 0.0
    %132 = vmatprep.subr.mxu0 0.0
    %133 = vmatpush1.msra.mxu0 0.0
    %134 = vmatprep.subr.mxu0 0.0
    %135 = vmatpush1.msra.mxu0 0.0
    %136 = vmatprep.subr.mxu0 0.0
    %137 = vmatpush1.msra.mxu0 0.0
    %138 = vmatprep.subr.mxu0 0.0
    %139 = vmatpush1.msra.mxu0 0.0
    %140 = vmatprep.subr.mxu0 0.0
    %141 = vmatpush1.msra.mxu0 0.0
    %142 = vmatprep.subr.mxu0 0.0
    %143 = vmatpush1.msra.mxu0 0.0
    %144 = vmatprep.subr.mxu0 0.0
    %145 = vmatpush1.msra.mxu0 0.0
    %146 = vmatprep.subr.mxu0 0.0
    %147 = vmatpush1.msra.mxu0 0.0
    %148 = vmatprep.subr.mxu0 0.0
    %v149 = vand.u32 %v37, 4294901760
    %v150 = vsub.f32 %v37, %v149
    %v151 = vand.u32 %v150, 4294901760
    %v152 = vsub.f32 %v150, %v151
    %v153 = vand.u32 %v152, 4294901760
    %154 = vmatpush1.msra.mxu0 %v153
    %155 = vmatprep.subr.mxu0 0.0
    %156 = vmatpush2.msra.mxu0 0.0
    %157 = vmatprep.subr.mxu0 0.0
    %158 = vmatpush2.msra.mxu0 0.0
    %159 = vmatprep.subr.mxu0 0.0
    %160 = vmatpush2.msra.mxu0 0.0
    %161 = vmatprep.subr.mxu0 0.0
    %162 = vmatpush2.msra.mxu0 0.0
    %163 = vmatprep.subr.mxu0 0.0
    %164 = vmatpush2.msra.mxu0 0.0
    %165 = vmatprep.subr.mxu0 0.0
    %166 = vmatpush2.msra.mxu0 0.0
    %167 = vmatprep.subr.mxu0 0.0
    %168 = vmatpush2.msra.mxu0 0.0
    %169 = vmatprep.subr.mxu0 0.0
    %170 = vmatpush2.msra.mxu0 0.0
    %171 = vmatprep.subr.mxu0 0.0
    %172 = vmatpush2.msra.mxu0 0.0
    %173 = vmatprep.subr.mxu0 0.0
    %174 = vmatpush2.msra.mxu0 0.0
    %175 = vmatprep.subr.mxu0 0.0
    %176 = vmatpush2.msra.mxu0 0.0
    %177 = vmatprep.subr.mxu0 0.0
    %178 = vmatpush2.msra.mxu0 0.0
    %179 = vmatprep.subr.mxu0 0.0
    %180 = vmatpush2.msra.mxu0 0.0
    %181 = vmatprep.subr.mxu0 0.0
    %182 = vmatpush2.msra.mxu0 0.0
    %183 = vmatprep.subr.mxu0 0.0
    %184 = vmatpush2.msra.mxu0 0.0
    %185 = vmatprep.subr.mxu0 0.0
    %186 = vmatpush2.msra.mxu0 0.0
    %187 = vmatprep.mubr.f32.mxu0 0.0
    %v188 = vand.u32 %v40, 4294901760
    %189 = vmatmul.mubr.f32.gmra.mxu0 %v188
    %v190 = vpop.f32.mrf.mxu0
    %v191 = vadd.f32 %v115, %v190
    %v192 = vpop.f32.mrf.mxu0
    %193 = vdwg.mxu0
    %194 = vmatprep.subr.mxu0 0.0
    %195 = vmatpush1.msra.mxu0 0.0
    %196 = vmatprep.subr.mxu0 0.0
    %197 = vmatpush1.msra.mxu0 0.0
    %198 = vmatprep.subr.mxu0 0.0
    %199 = vmatpush1.msra.mxu0 0.0
    %200 = vmatprep.subr.mxu0 0.0
    %201 = vmatpush1.msra.mxu0 0.0
    %202 = vmatprep.subr.mxu0 0.0
    %203 = vmatpush1.msra.mxu0 0.0
    %204 = vmatprep.subr.mxu0 0.0
    %205 = vmatpush1.msra.mxu0 0.0
    %206 = vmatprep.subr.mxu0 0.0
    %207 = vmatpush1.msra.mxu0 0.0
    %208 = vmatprep.subr.mxu0 0.0
    %209 = vmatpush1.msra.mxu0 0.0
    %210 = vmatprep.subr.mxu0 0.0
    %211 = vmatpush1.msra.mxu0 0.0
    %212 = vmatprep.subr.mxu0 0.0
    %213 = vmatpush1.msra.mxu0 0.0
    %214 = vmatprep.subr.mxu0 0.0
    %215 = vmatpush1.msra.mxu0 0.0
    %216 = vmatprep.subr.mxu0 0.0
    %217 = vmatpush1.msra.mxu0 0.0
    %218 = vmatprep.subr.mxu0 0.0
    %219 = vmatpush1.msra.mxu0 0.0
    %220 = vmatprep.subr.mxu0 0.0
    %221 = vmatpush1.msra.mxu0 0.0
    %222 = vmatprep.subr.mxu0 0.0
    %223 = vmatpush1.msra.mxu0 0.0
    %224 = vmatprep.subr.mxu0 0.0
    %v225 = vand.u32 %v37, 4294901760
    %v226 = vsub.f32 %v37, %v225
    %227 = vmatpush1.msra.mxu0 %v226
    %228 = vmatprep.subr.mxu0 0.0
    %229 = vmatpush2.msra.mxu0 0.0
    %230 = vmatprep.subr.mxu0 0.0
    %231 = vmatpush2.msra.mxu0 0.0
    %232 = vmatprep.subr.mxu0 0.0
    %233 = vmatpush2.msra.mxu0 0.0
    %234 = vmatprep.subr.mxu0 0.0
    %235 = vmatpush2.msra.mxu0 0.0
    %236 = vmatprep.subr.mxu0 0.0
    %237 = vmatpush2.msra.mxu0 0.0
    %238 = vmatprep.subr.mxu0 0.0
    %239 = vmatpush2.msra.mxu0 0.0
    %240 = vmatprep.subr.mxu0 0.0
    %241 = vmatpush2.msra.mxu0 0.0
    %242 = vmatprep.subr.mxu0 0.0
    %243 = vmatpush2.msra.mxu0 0.0
    %244 = vmatprep.subr.mxu0 0.0
    %245 = vmatpush2.msra.mxu0 0.0
    %246 = vmatprep.subr.mxu0 0.0
    %247 = vmatpush2.msra.mxu0 0.0
    %248 = vmatprep.subr.mxu0 0.0
    %249 = vmatpush2.msra.mxu0 0.0
    %250 = vmatprep.subr.mxu0 0.0
    %251 = vmatpush2.msra.mxu0 0.0
    %252 = vmatprep.subr.mxu0 0.0
    %253 = vmatpush2.msra.mxu0 0.0
    %254 = vmatprep.subr.mxu0 0.0
    %255 = vmatpush2.msra.mxu0 0.0
    %256 = vmatprep.subr.mxu0 0.0
    %257 = vmatpush2.msra.mxu0 0.0
    %258 = vmatprep.subr.mxu0 0.0
    %259 = vmatpush2.msra.mxu0 0.0
    %260 = vmatprep.mubr.f32.mxu0 0.0
    %v261 = vand.u32 %v40, 4294901760
    %v262 = vsub.f32 %v40, %v261
    %263 = vmatmul.mubr.f32.gmra.mxu0 %v262
    %v264 = vpop.f32.mrf.mxu0
    %v265 = vadd.f32 %v191, %v264
    %v266 = vpop.f32.mrf.mxu0
    %267 = vdwg.mxu0
    %268 = vmatprep.subr.mxu0 0.0
    %269 = vmatpush1.msra.mxu0 0.0
    %270 = vmatprep.subr.mxu0 0.0
    %271 = vmatpush1.msra.mxu0 0.0
    %272 = vmatprep.subr.mxu0 0.0
    %273 = vmatpush1.msra.mxu0 0.0
    %274 = vmatprep.subr.mxu0 0.0
    %275 = vmatpush1.msra.mxu0 0.0
    %276 = vmatprep.subr.mxu0 0.0
    %277 = vmatpush1.msra.mxu0 0.0
    %278 = vmatprep.subr.mxu0 0.0
    %279 = vmatpush1.msra.mxu0 0.0
    %280 = vmatprep.subr.mxu0 0.0
    %281 = vmatpush1.msra.mxu0 0.0
    %282 = vmatprep.subr.mxu0 0.0
    %283 = vmatpush1.msra.mxu0 0.0
    %284 = vmatprep.subr.mxu0 0.0
    %285 = vmatpush1.msra.mxu0 0.0
    %286 = vmatprep.subr.mxu0 0.0
    %287 = vmatpush1.msra.mxu0 0.0
    %288 = vmatprep.subr.mxu0 0.0
    %289 = vmatpush1.msra.mxu0 0.0
    %290 = vmatprep.subr.mxu0 0.0
    %291 = vmatpush1.msra.mxu0 0.0
    %292 = vmatprep.subr.mxu0 0.0
    %293 = vmatpush1.msra.mxu0 0.0
    %294 = vmatprep.subr.mxu0 0.0
    %295 = vmatpush1.msra.mxu0 0.0
    %296 = vmatprep.subr.mxu0 0.0
    %297 = vmatpush1.msra.mxu0 0.0
    %298 = vmatprep.subr.mxu0 0.0
    %v299 = vand.u32 %v37, 4294901760
    %300 = vmatpush1.msra.mxu0 %v299
    %301 = vmatprep.subr.mxu0 0.0
    %302 = vmatpush2.msra.mxu0 0.0
    %303 = vmatprep.subr.mxu0 0.0
    %304 = vmatpush2.msra.mxu0 0.0
    %305 = vmatprep.subr.mxu0 0.0
    %306 = vmatpush2.msra.mxu0 0.0
    %307 = vmatprep.subr.mxu0 0.0
    %308 = vmatpush2.msra.mxu0 0.0
    %309 = vmatprep.subr.mxu0 0.0
    %310 = vmatpush2.msra.mxu0 0.0
    %311 = vmatprep.subr.mxu0 0.0
    %312 = vmatpush2.msra.mxu0 0.0
    %313 = vmatprep.subr.mxu0 0.0
    %314 = vmatpush2.msra.mxu0 0.0
    %315 = vmatprep.subr.mxu0 0.0
    %316 = vmatpush2.msra.mxu0 0.0
    %317 = vmatprep.subr.mxu0 0.0
    %318 = vmatpush2.msra.mxu0 0.0
    %319 = vmatprep.subr.mxu0 0.0
    %320 = vmatpush2.msra.mxu0 0.0
    %321 = vmatprep.subr.mxu0 0.0
    %322 = vmatpush2.msra.mxu0 0.0
    %323 = vmatprep.subr.mxu0 0.0
    %324 = vmatpush2.msra.mxu0 0.0
    %325 = vmatprep.subr.mxu0 0.0
    %326 = vmatpush2.msra.mxu0 0.0
    %327 = vmatprep.subr.mxu0 0.0
    %328 = vmatpush2.msra.mxu0 0.0
    %329 = vmatprep.subr.mxu0 0.0
    %330 = vmatpush2.msra.mxu0 0.0
    %331 = vmatprep.subr.mxu0 0.0
    %332 = vmatpush2.msra.mxu0 0.0
    %333 = vmatprep.mubr.f32.mxu0 0.0
    %v334 = vand.u32 %v40, 4294901760
    %v335 = vsub.f32 %v40, %v334
    %v336 = vand.u32 %v335, 4294901760
    %337 = vmatmul.mubr.f32.gmra.mxu0 %v336
    %v338 = vpop.f32.mrf.mxu0
    %v339 = vadd.f32 %v265, %v338
    %v340 = vpop.f32.mrf.mxu0
    %341 = vdwg.mxu0
    %342 = vmatprep.subr.mxu0 0.0
    %343 = vmatpush1.msra.mxu0 0.0
    %344 = vmatprep.subr.mxu0 0.0
    %345 = vmatpush1.msra.mxu0 0.0
    %346 = vmatprep.subr.mxu0 0.0
    %347 = vmatpush1.msra.mxu0 0.0
    %348 = vmatprep.subr.mxu0 0.0
    %349 = vmatpush1.msra.mxu0 0.0
    %350 = vmatprep.subr.mxu0 0.0
    %351 = vmatpush1.msra.mxu0 0.0
    %352 = vmatprep.subr.mxu0 0.0
    %353 = vmatpush1.msra.mxu0 0.0
    %354 = vmatprep.subr.mxu0 0.0
    %355 = vmatpush1.msra.mxu0 0.0
    %356 = vmatprep.subr.mxu0 0.0
    %357 = vmatpush1.msra.mxu0 0.0
    %358 = vmatprep.subr.mxu0 0.0
    %359 = vmatpush1.msra.mxu0 0.0
    %360 = vmatprep.subr.mxu0 0.0
    %361 = vmatpush1.msra.mxu0 0.0
    %362 = vmatprep.subr.mxu0 0.0
    %363 = vmatpush1.msra.mxu0 0.0
    %364 = vmatprep.subr.mxu0 0.0
    %365 = vmatpush1.msra.mxu0 0.0
    %366 = vmatprep.subr.mxu0 0.0
    %367 = vmatpush1.msra.mxu0 0.0
    %368 = vmatprep.subr.mxu0 0.0
    %369 = vmatpush1.msra.mxu0 0.0
    %370 = vmatprep.subr.mxu0 0.0
    %371 = vmatpush1.msra.mxu0 0.0
    %372 = vmatprep.subr.mxu0 0.0
    %v373 = vand.u32 %v37, 4294901760
    %v374 = vsub.f32 %v37, %v373
    %v375 = vand.u32 %v374, 4294901760
    %376 = vmatpush1.msra.mxu0 %v375
    %377 = vmatprep.subr.mxu0 0.0
    %378 = vmatpush2.msra.mxu0 0.0
    %379 = vmatprep.subr.mxu0 0.0
    %380 = vmatpush2.msra.mxu0 0.0
    %381 = vmatprep.subr.mxu0 0.0
    %382 = vmatpush2.msra.mxu0 0.0
    %383 = vmatprep.subr.mxu0 0.0
    %384 = vmatpush2.msra.mxu0 0.0
    %385 = vmatprep.subr.mxu0 0.0
    %386 = vmatpush2.msra.mxu0 0.0
    %387 = vmatprep.subr.mxu0 0.0
    %388 = vmatpush2.msra.mxu0 0.0
    %389 = vmatprep.subr.mxu0 0.0
    %390 = vmatpush2.msra.mxu0 0.0
    %391 = vmatprep.subr.mxu0 0.0
    %392 = vmatpush2.msra.mxu0 0.0
    %393 = vmatprep.subr.mxu0 0.0
    %394 = vmatpush2.msra.mxu0 0.0
    %395 = vmatprep.subr.mxu0 0.0
    %396 = vmatpush2.msra.mxu0 0.0
    %397 = vmatprep.subr.mxu0 0.0
    %398 = vmatpush2.msra.mxu0 0.0
    %399 = vmatprep.subr.mxu0 0.0
    %400 = vmatpush2.msra.mxu0 0.0
    %401 = vmatprep.subr.mxu0 0.0
    %402 = vmatpush2.msra.mxu0 0.0
    %403 = vmatprep.subr.mxu0 0.0
    %404 = vmatpush2.msra.mxu0 0.0
    %405 = vmatprep.subr.mxu0 0.0
    %406 = vmatpush2.msra.mxu0 0.0
    %407 = vmatprep.subr.mxu0 0.0
    %408 = vmatpush2.msra.mxu0 0.0
    %409 = vmatprep.mubr.f32.mxu0 0.0
    %v410 = vand.u32 %v40, 4294901760
    %411 = vmatmul.mubr.f32.gmra.mxu0 %v410
    %v412 = vpop.f32.mrf.mxu0
    %v413 = vadd.f32 %v339, %v412
    %v414 = vpop.f32.mrf.mxu0
    %415 = vdwg.mxu0
    %416 = vmatprep.subr.mxu0 0.0
    %417 = vmatpush1.msra.mxu0 0.0
    %418 = vmatprep.subr.mxu0 0.0
    %419 = vmatpush1.msra.mxu0 0.0
    %420 = vmatprep.subr.mxu0 0.0
    %421 = vmatpush1.msra.mxu0 0.0
    %422 = vmatprep.subr.mxu0 0.0
    %423 = vmatpush1.msra.mxu0 0.0
    %424 = vmatprep.subr.mxu0 0.0
    %425 = vmatpush1.msra.mxu0 0.0
    %426 = vmatprep.subr.mxu0 0.0
    %427 = vmatpush1.msra.mxu0 0.0
    %428 = vmatprep.subr.mxu0 0.0
    %429 = vmatpush1.msra.mxu0 0.0
    %430 = vmatprep.subr.mxu0 0.0
    %431 = vmatpush1.msra.mxu0 0.0
    %432 = vmatprep.subr.mxu0 0.0
    %433 = vmatpush1.msra.mxu0 0.0
    %434 = vmatprep.subr.mxu0 0.0
    %435 = vmatpush1.msra.mxu0 0.0
    %436 = vmatprep.subr.mxu0 0.0
    %437 = vmatpush1.msra.mxu0 0.0
    %438 = vmatprep.subr.mxu0 0.0
    %439 = vmatpush1.msra.mxu0 0.0
    %440 = vmatprep.subr.mxu0 0.0
    %441 = vmatpush1.msra.mxu0 0.0
    %442 = vmatprep.subr.mxu0 0.0
    %443 = vmatpush1.msra.mxu0 0.0
    %444 = vmatprep.subr.mxu0 0.0
    %445 = vmatpush1.msra.mxu0 0.0
    %446 = vmatprep.subr.mxu0 0.0
    %v447 = vand.u32 %v37, 4294901760
    %448 = vmatpush1.msra.mxu0 %v447
    %449 = vmatprep.subr.mxu0 0.0
    %450 = vmatpush2.msra.mxu0 0.0
    %451 = vmatprep.subr.mxu0 0.0
    %452 = vmatpush2.msra.mxu0 0.0
    %453 = vmatprep.subr.mxu0 0.0
    %454 = vmatpush2.msra.mxu0 0.0
    %455 = vmatprep.subr.mxu0 0.0
    %456 = vmatpush2.msra.mxu0 0.0
    %457 = vmatprep.subr.mxu0 0.0
    %458 = vmatpush2.msra.mxu0 0.0
    %459 = vmatprep.subr.mxu0 0.0
    %460 = vmatpush2.msra.mxu0 0.0
    %461 = vmatprep.subr.mxu0 0.0
    %462 = vmatpush2.msra.mxu0 0.0
    %463 = vmatprep.subr.mxu0 0.0
    %464 = vmatpush2.msra.mxu0 0.0
    %465 = vmatprep.subr.mxu0 0.0
    %466 = vmatpush2.msra.mxu0 0.0
    %467 = vmatprep.subr.mxu0 0.0
    %468 = vmatpush2.msra.mxu0 0.0
    %469 = vmatprep.subr.mxu0 0.0
    %470 = vmatpush2.msra.mxu0 0.0
    %471 = vmatprep.subr.mxu0 0.0
    %472 = vmatpush2.msra.mxu0 0.0
    %473 = vmatprep.subr.mxu0 0.0
    %474 = vmatpush2.msra.mxu0 0.0
    %475 = vmatprep.subr.mxu0 0.0
    %476 = vmatpush2.msra.mxu0 0.0
    %477 = vmatprep.subr.mxu0 0.0
    %478 = vmatpush2.msra.mxu0 0.0
    %479 = vmatprep.subr.mxu0 0.0
    %480 = vmatpush2.msra.mxu0 0.0
    %481 = vmatprep.mubr.f32.mxu0 0.0
    %v482 = vand.u32 %v40, 4294901760
    %483 = vmatmul.mubr.f32.gmra.mxu0 %v482
    %v484 = vpop.f32.mrf.mxu0
    %v485 = vadd.f32 %v413, %v484
    %v486 = vpop.f32.mrf.mxu0
    %487 = vdwg.mxu0
    %v489 = vlaneseq
    %v490 = vshrl.u32 %v489, 7
    %v491 = vsub.s32 0, %v490
    %v492 = vrot.slane %v36, %v491
    %v494 = vadd.f32 %v485, %v492
    %495 = vst [vmem:[#allocation7] sm:$0xff] %v494
    %v497 = vcombine.high %v485, %v485
    %v499 = vunpack.c.l.s4 1966171168
    %v500 = vunpack.c.0.s8 %v499
    %v501 = vlaneseq
    %v502 = vshrl.u32 %v501, 7
    %v503 = vsub.s32 %v500, %v502
    %v504 = vrot.slane %v497, %v503
    %v505 = vcombine.high %v504, %v504
    %v507 = vunpack.c.l.s4 1966171168
    %v508 = vunpack.c.0.s8 %v507
    %v509 = vlaneseq
    %v510 = vshrl.u32 %v509, 7
    %v511 = vsub.s32 %v508, %v510
    %v512 = vrot.slane %v505, %v511
    %v513 = vcombine.high %v512, %v512
    %v515 = vadd.f32 %v36, %v513
    %516 = vst [vmem:[#allocation2] sm:$0x1] %v515
    // Predicated region
    $region14: #{tpu_custom_call.1} parent=1 // pred_check
      _
    $region15: #{tpu_custom_call.1} parent=1 // pred_check_branch
      %518 = sbr.rel (0) target = $region17
    $region16: #{tpu_custom_call.1} parent=1 // pred_region
      %s520 = ssub.s32 128, 128
      %521 = vsyncadd [#allocation6], %s520
      %s523 = sshll.u32 [#allocation7], 4
      %s524 = int_to_ptr.vmem [resolvable:$true] %s523
      %526 = dma.vmem_to_hbm [thread:$0]  %s524, 128, %s1, [#allocation6]
    $region17: #{tpu_custom_call.1} parent=1 // pred_fallthru
      _
    // Predicated region
    $region18: #{tpu_custom_call.1} parent=1 // pred_check
      _
    $region19: #{tpu_custom_call.1} parent=1 // pred_check_branch
      %528 = sbr.rel (0) target = $region21
    $region20: #{tpu_custom_call.1} parent=1 // pred_region
      %529 = dma.done [#allocation6], 128
    $region21: #{tpu_custom_call.1} parent=1 // pred_fallthru
      _
    %530 = vsyncpa [#allocation5], 1
    %531 = vsyncpa [#allocation6], 1

</llo_original>
